<compile_context>
chip_gen: v7x
topology: tpu7x:2x2x1
jax: 0.10.0
libtpu: 0.0.40
codegen_flags: <defaults>
</compile_context>

<pallas_src>
import numpy as np

import jax
import jax.numpy as jnp
from jax.experimental import pallas as pl
from jax.experimental.pallas import tpu as pltpu


# ----------------------------------------------------------------------------
# Pallas kernel (factory over "is the input complex?")
# ----------------------------------------------------------------------------
def _make_dc_kernel(complex_input: bool):
    def kernel(coef_ref, *refs):
        if complex_input:
            xr_ref, xi_ref, yr_ref, yi_ref = refs
        else:
            xr_ref, yr_ref, yi_ref = refs
        W = xr_ref.shape[-1]
        lane_axis = len(xr_ref.shape) - 1          # pltpu.roll needs a non-negative axis

        # Resident (3, W) coefficient rows; (1, W) slices broadcast over the batch sublanes.
        t = coef_ref[0:1, :]     # DC transmission per lane (1.0 on pass-through lanes)
        kn = coef_ref[1:2, :]    # k on lanes whose partner is the NEXT lane, else 0
        kp = coef_ref[2:3, :]    # k on lanes whose partner is the PREVIOUS lane, else 0

        xr = xr_ref[...]
        # Partner contribution k * x[partner].  Positive shifts only
        # (roll by W-1 == roll by -1).  Wrap-around lanes always have kn/kp == 0 because
        # offset + 2*sample_arch <= W is enforced in the wrapper, so wrap is harmless.
        pr = (kn * pltpu.roll(xr, shift=W - 1, axis=lane_axis)
              + kp * pltpu.roll(xr, shift=1, axis=lane_axis))
        if complex_input:
            xi = xi_ref[...]
            pi = (kn * pltpu.roll(xi, shift=W - 1, axis=lane_axis)
                  + kp * pltpu.roll(xi, shift=1, axis=lane_axis))
            # y = t * x_self + j * k * x_partner   (split into real / imag planes)
            yr_ref[...] = t * xr - pi
            yi_ref[...] = t * xi + pr
        else:
            # imag(x) == 0 for promoted-real inputs: skip the zero plane entirely.
            yr_ref[...] = t * xr
            yi_ref[...] = pr

    return kernel


# ----------------------------------------------------------------------------
# Tile / VMEM sizing
# ----------------------------------------------------------------------------
def _round_up(a, b):
    return (a + b - 1) // b * b


def _vmem_budget_bytes():
    """Per-generation budget for the double-buffered block working set."""
    try:
        cap = int(pltpu.get_tpu_info().vmem_capacity_bytes)
    except Exception:
        cap = 64 << 20                      # conservative (v7x per-TC VMEM)
    # v5e/v6e (128 MiB) -> 24 MiB, v7x (64 MiB) -> 16 MiB; always leaves ample headroom.
    return max(8 << 20, min(24 << 20, cap // 4))


def _choose_tb(B, W, n_streams, budget):
    bytes_per_row = n_streams * W * 4
    # ~4 MiB of combined in+out HBM traffic per grid step (amortizes ~0.35us/step overhead).
    tb = max(8, (4 << 20) // bytes_per_row)
    # Double-buffered blocks for all streams must fit the VMEM budget.
    tb = min(tb, max(8, budget // (2 * bytes_per_row)))
    # Keep >= 4 grid steps on large batches so "parallel" can shard across cores (v7x 2 TC).
    tb = min(tb, _round_up(pl.cdiv(B, 4), 8))
    tb = max(8, (tb // 8) * 8)              # sublane dim multiple of 8
    return B if tb >= B else tb             # single full-batch block otherwise


# ----------------------------------------------------------------------------
# Fused mixing: Pallas path and tiny-problem pure-JAX fallback
# ----------------------------------------------------------------------------
def _dc_mix_pallas(coef, xr, xi=None):
    B, W = xr.shape
    complex_input = xi is not None
    n_streams = 4 if complex_input else 3

    budget = _vmem_budget_bytes()
    TB = _choose_tb(B, W, n_streams, budget)
    grid = (pl.cdiv(B, TB),)                # ragged last block: padded reads, masked writes

    coef_spec = pl.BlockSpec((3, W), lambda i: (0, 0))   # grid-invariant, stays resident
    x_spec = pl.BlockSpec((TB, W), lambda i: (i, 0))     # lane-dense full-width blocks

    kernel = _make_dc_kernel(complex_input)
    inputs = (coef, xr, xi) if complex_input else (coef, xr)
    in_specs = [coef_spec] + [x_spec] * (len(inputs) - 1)

    yr, yi = pl.pallas_call(
        kernel,
        grid=grid,
        in_specs=in_specs,
        out_specs=[x_spec, x_spec],
        out_shape=[jax.ShapeDtypeStruct((B, W), jnp.float32),
                   jax.ShapeDtypeStruct((B, W), jnp.float32)],
        compiler_params=pltpu.CompilerParams(
            dimension_semantics=("parallel",),
            vmem_limit_bytes=int(budget + (4 << 20))),
    )(*inputs)
    return yr, yi


def _dc_mix_jax(coef, xr, xi=None):
    """Pure-JAX fallback for tiny problems (pallas_call fixed overhead dominates)."""
    t, kn, kp = coef[0], coef[1], coef[2]
    pr = kn * jnp.roll(xr, -1, axis=-1) + kp * jnp.roll(xr, 1, axis=-1)
    if xi is None:
        return t * xr, pr
    pi = kn * jnp.roll(xi, -1, axis=-1) + kp * jnp.roll(xi, 1, axis=-1)
    return t * xr - pi, t * xi + pr


# ----------------------------------------------------------------------------
# Per-lane coefficient construction (tiny O(W) work, done once outside the kernel)
# ----------------------------------------------------------------------------
def _build_coef(weight, sa, offset, W):
    t = jnp.asarray(weight, jnp.float32)[:sa]
    k = jnp.sqrt(1.0 - t * t + 1e-6)                 # precomputed: no in-kernel sqrt
    lane = jnp.arange(W, dtype=jnp.int32)
    rel = lane - offset
    active = (rel >= 0) & (rel < 2 * sa)
    pair = jnp.clip(rel // 2, 0, sa - 1)
    even = (rel % 2) == 0                            # first waveguide of its pair
    t_row = jnp.where(active, t[pair], 1.0)          # pass-through lanes: t = 1
    k_row = jnp.where(active, k[pair], 0.0)          # pass-through lanes: k = 0
    k_next = jnp.where(even, k_row, 0.0)             # partner is next lane
    k_prev = jnp.where(jnp.logical_not(even), k_row, 0.0)   # partner is previous lane
    return jnp.stack([t_row, k_next, k_prev], axis=0)        # (3, W)


# ----------------------------------------------------------------------------
# Module-equivalent forward (build_weight + forward of SuperDCFrontShareLayer)
# ----------------------------------------------------------------------------
def super_dc_front_share_forward(x, weight, sample_arch, offset, max_arch,
                                 *, min_pallas_elems=1024):
    """Forward pass (non-binary weights, no DC noise, not fast_mode)."""
    sa = int(min(sample_arch, max_arch))
    lead = x.shape[:-1]
    W = int(x.shape[-1])
    B = int(np.prod(lead)) if lead else 1

    if sa <= 0:
        return x.astype(jnp.complex64)
    if offset < 0 or offset + 2 * sa > W:
        raise ValueError(
            f"offset ({offset}) + 2*sample_arch ({2 * sa}) must be <= n_waveguides ({W})")

    coef = _build_coef(weight, sa, offset, W)

    if jnp.iscomplexobj(x):
        xr = jnp.real(x).astype(jnp.float32).reshape(B, W)
        xi = jnp.imag(x).astype(jnp.float32).reshape(B, W)
        planes = (xr, xi)
    else:
        xr = x.astype(jnp.float32).reshape(B, W)
        planes = (xr, None)

    if B * W < min_pallas_elems:
        yr, yi = _dc_mix_jax(coef, *planes)
    else:
        yr, yi = _dc_mix_pallas(coef, *planes)

    # Complex re-assembly stays as one fused XLA elementwise op (no complex dtype in Mosaic).
    out = jax.lax.complex(yr, yi).reshape(lead + (W,))
    return out.astype(jnp.complex64)


# ----------------------------------------------------------------------------
# Pure-JAX reference (direct transcription of the PyTorch forward)
# ----------------------------------------------------------------------------
def reference_forward(x, weight, sample_arch, offset, max_arch):
    x = x.astype(jnp.complex64)
    sa = int(min(sample_arch, max_arch))
    w = weight[:sa] if sa < max_arch else weight
    t = w
    k = jnp.sqrt(1.0 - w * w + 1e-6)
    w11 = t.astype(jnp.complex64)
    w12 = (1j * k).astype(jnp.complex64)
    Wmat = jnp.stack([w11, w12, w12, w11], axis=-1).reshape(sa, 2, 2)
    n = 2 * sa
    if n < x.shape[-1]:
        seg = x[..., offset:offset + n]
        out = jnp.matmul(Wmat[None], seg.reshape(-1, sa, 2, 1))
        out = out.reshape(x.shape[:-1] + (n,))
        out = jnp.concatenate([x[..., :offset], out, x[..., offset + n:]], axis=-1)
    else:
        out = jnp.matmul(Wmat[None], x.reshape(-1, sa, 2, 1))
        out = out.reshape(x.shape[:-1] + (n,))
    return out


if __name__ == "__main__":
    key = jax.random.PRNGKey(0)
    k0, k1, k2, k3, k4 = jax.random.split(key, 5)

    # --- Config 1: real input, offset > 0, sample_arch < max_arch, ragged batch grid
    n_waveguides = 128
    offset = 2
    max_arch = (n_waveguides - offset) // 2          # 63
    sample_arch = 60                                 # pass-through lanes on both sides
    weight = jax.random.uniform(k0, (max_arch,), jnp.float32, 0.3, 0.9)

    x = jax.random.normal(k1, (4, 17, n_waveguides), dtype=jnp.float32)   # B=68 (ragged blocks)

    out = jax.block_until_ready(
        super_dc_front_share_forward(x, weight, sample_arch, offset, max_arch))
    ref = jax.block_until_ready(reference_forward(x, weight, sample_arch, offset, max_arch))

    assert out.shape == ref.shape == (4, 17, n_waveguides), (out.shape, ref.shape)
    assert out.dtype == jnp.complex64
    np.testing.assert_allclose(np.asarray(out), np.asarray(ref), rtol=1e-5, atol=1e-5)

    # --- Config 2: complex input, offset == 0, full coverage (n_sample == W branch)
    n_waveguides2 = 128
    offset2 = 0
    max_arch2 = n_waveguides2 // 2                   # 64
    sample_arch2 = max_arch2
    weight2 = jax.random.uniform(k2, (max_arch2,), jnp.float32, 0.3, 0.9)

    xc = (jax.random.normal(k3, (2, 8, n_waveguides2), dtype=jnp.float32)
          + 1j * jax.random.normal(k4, (2, 8, n_waveguides2), dtype=jnp.float32)
          ).astype(jnp.complex64)

    out2 = jax.block_until_ready(
        super_dc_front_share_forward(xc, weight2, sample_arch2, offset2, max_arch2))
    ref2 = jax.block_until_ready(
        reference_forward(xc, weight2, sample_arch2, offset2, max_arch2))

    assert out2.shape == ref2.shape == (2, 8, n_waveguides2)
    np.testing.assert_allclose(np.asarray(out2), np.asarray(ref2), rtol=1e-5, atol=1e-5)

    # --- Config 3: tiny problem -> pure-JAX fallback path
    n_waveguides3 = 8
    offset3 = 0
    max_arch3 = 4
    sample_arch3 = 3
    weight3 = jax.random.uniform(k0, (max_arch3,), jnp.float32, 0.3, 0.9)
    x3 = jax.random.normal(k1, (2, 3, n_waveguides3), dtype=jnp.float32)

    out3 = jax.block_until_ready(
        super_dc_front_share_forward(x3, weight3, sample_arch3, offset3, max_arch3))
    ref3 = jax.block_until_ready(
        reference_forward(x3, weight3, sample_arch3, offset3, max_arch3))
    np.testing.assert_allclose(np.asarray(out3), np.asarray(ref3), rtol=1e-5, atol=1e-5)

    print("KERNEL_OK")
</pallas_src>

<mosaic_0001>
module attributes {stable_mosaic.version = 11 : i64} {
  func.func @kernel(%arg0: i32, %arg1: memref<3x128xf32, #tpu.memory_space<vmem>>, %arg2: memref<24x128xf32, #tpu.memory_space<vmem>>, %arg3: memref<24x128xf32, #tpu.memory_space<vmem>>, %arg4: memref<24x128xf32, #tpu.memory_space<vmem>>) attributes {dimension_semantics = [#tpu.dimension_semantics<parallel>], iteration_bounds = array<i64: 3>, scalar_prefetch = 0 : i64, scratch_operands = 0 : i64, tpu.core_type = #tpu.core_type<tc>, window_params = [{pipeline_mode = #tpu.pipeline_mode<synchronous>, transform_indices = @transform_0, window_bounds = array<i64: 3, 128>}, {transform_indices = @transform_1, window_bounds = array<i64: 24, 128>}, {transform_indices = @transform_2, window_bounds = array<i64: 24, 128>}, {transform_indices = @transform_3, window_bounds = array<i64: 24, 128>}]} {
    %c0 = arith.constant 0 : index
    %c0_0 = arith.constant 0 : index
    %0 = vector.load %arg1[%c0, %c0_0] : memref<3x128xf32, #tpu.memory_space<vmem>>, vector<1x128xf32>
    %c1 = arith.constant 1 : index
    %c0_1 = arith.constant 0 : index
    %1 = vector.load %arg1[%c1, %c0_1] : memref<3x128xf32, #tpu.memory_space<vmem>>, vector<1x128xf32>
    %c2 = arith.constant 2 : index
    %c0_2 = arith.constant 0 : index
    %2 = vector.load %arg1[%c2, %c0_2] : memref<3x128xf32, #tpu.memory_space<vmem>>, vector<1x128xf32>
    %c0_3 = arith.constant 0 : index
    %c0_4 = arith.constant 0 : index
    %3 = vector.load %arg2[%c0_3, %c0_4] : memref<24x128xf32, #tpu.memory_space<vmem>>, vector<24x128xf32>
    %c127_i32 = arith.constant 127 : i32
    %4 = tpu.dynamic_rotate %3 by %c127_i32 dim 1 : vector<24x128xf32>, i32 -> vector<24x128xf32>
    %5 = vector.broadcast %1 : vector<1x128xf32> to vector<24x128xf32>
    %6 = arith.mulf %5, %4 : vector<24x128xf32>
    %c1_i32 = arith.constant 1 : i32
    %7 = tpu.dynamic_rotate %3 by %c1_i32 dim 1 : vector<24x128xf32>, i32 -> vector<24x128xf32>
    %8 = vector.broadcast %2 : vector<1x128xf32> to vector<24x128xf32>
    %9 = arith.mulf %8, %7 : vector<24x128xf32>
    %10 = arith.addf %6, %9 : vector<24x128xf32>
    %11 = vector.broadcast %0 : vector<1x128xf32> to vector<24x128xf32>
    %12 = arith.mulf %11, %3 : vector<24x128xf32>
    %c0_5 = arith.constant 0 : index
    %c0_6 = arith.constant 0 : index
    %13 = vector.load %arg3[%c0_5, %c0_6] : memref<24x128xf32, #tpu.memory_space<vmem>>, vector<24x128xf32>
    tpu.vector_store %arg3[%c0_5, %c0_6], %12 {strides = array<i32>} : memref<24x128xf32, #tpu.memory_space<vmem>>, vector<24x128xf32>,
    %c0_7 = arith.constant 0 : index
    %c0_8 = arith.constant 0 : index
    %14 = vector.load %arg4[%c0_7, %c0_8] : memref<24x128xf32, #tpu.memory_space<vmem>>, vector<24x128xf32>
    tpu.vector_store %arg4[%c0_7, %c0_8], %10 {strides = array<i32>} : memref<24x128xf32, #tpu.memory_space<vmem>>, vector<24x128xf32>,
    return
  }
  func.func @transform_0(%arg0: i32) -> (i32, i32) {
    %c0_i32 = arith.constant 0 : i32
    %c0_i32_0 = arith.constant 0 : i32
    %c0_i32_1 = arith.constant 0 : i32
    return %c0_i32, %c0_i32_0 : i32, i32
  }
  func.func @transform_1(%arg0: i32) -> (i32, i32) {
    %c0_i32 = arith.constant 0 : i32
    %c0_i32_0 = arith.constant 0 : i32
    return %arg0, %c0_i32 : i32, i32
  }
  func.func @transform_2(%arg0: i32) -> (i32, i32) {
    %c0_i32 = arith.constant 0 : i32
    %c0_i32_0 = arith.constant 0 : i32
    return %arg0, %c0_i32 : i32, i32
  }
  func.func @transform_3(%arg0: i32) -> (i32, i32) {
    %c0_i32 = arith.constant 0 : i32
    %c0_i32_0 = arith.constant 0 : i32
    return %arg0, %c0_i32 : i32, i32
  }
}

</mosaic_0001>

<llo_original>
// kernel: tpu_custom_call.1
$region0: #{tpu_custom_call.1}
  #allocation0 [shape = 'u32[]', space=smem, size = 0x4, offset = 0x4, fixed_abs, tag = 'smem constant byte address 0x4 - core index']
  #allocation1 [shape = 'u32[144,128]{1,0:T(1,128)}', space=vmem, size = 0x12000, scoped, tag = 'internal scratch']
  %s0 = inlined_call_operand.hbm [shape: f32[3,128], index: 0, kind: input, shape index: {}]
  %s1 = inlined_call_operand.hbm [shape: f32[68,128], index: 1, kind: input, shape index: {}]
  %s2 = inlined_call_operand.hbm [shape: f32[68,128], index: 2, kind: output, shape index: {0}]
  %s3 = inlined_call_operand.hbm [shape: f32[68,128], index: 3, kind: output, shape index: {1}]
  %4 = xla_tuple %s2, %s3
  %s5 = sld [smem:[#allocation0]]
  $region57: #{tpu_custom_call.1} parent=0
    _
  %s7 = ssub.s32 1, %s5
  %s8 = scalar_select 0, %s7, %s5
  $region1: #{tpu_custom_call.1} parent=0
    #allocation2 [shape = 'u8[2048]{0}', space=vmem, size = 0x800, scoped, tag = 'input window, operand 0, single buffered']
    #allocation3 [shape = 's32[2]{0}', space=sflag, size = 0x8, scoped, tag = 'scoped memory for tpu_custom_call.1']
    #allocation4 [shape = 's32[2]{0}', space=sflag, size = 0x8, scoped, tag = 'scoped memory for tpu_custom_call.1']
    #allocation5 [shape = 'u8[24576]{0}', space=vmem, size = 0x6000, scoped, tag = 'input window, operand 1']
    #allocation6 [shape = 's32[2]{0}', space=sflag, size = 0x8, scoped, tag = 'scoped memory for tpu_custom_call.1']
    #allocation7 [shape = 'u8[24576]{0}', space=vmem, size = 0x6000, scoped, tag = 'output window, operand 0']
    #allocation8 [shape = 'u8[24576]{0}', space=vmem, size = 0x6000, scoped, tag = 'output window, operand 1']
    #allocation9 [shape = 's32[2]{0}', space=sflag, size = 0x8, scoped, tag = 'scoped memory for tpu_custom_call.1']
    %9 = vsyncpa [#allocation3], 0
    %10 = vsyncpa [#allocation6], 0
    %s11 = scalar_lea.sflag [#allocation6], 1
    %12 = vsyncpa %s11, 0
    %13 = vsyncpa [#allocation4], 0
    %s14 = scalar_lea.sflag [#allocation4], 1
    %15 = vsyncpa %s14, 0
    %16 = vsyncpa [#allocation9], 0
    %s17 = scalar_lea.sflag [#allocation9], 1
    %18 = vsyncpa %s17, 0
    loop: start=0, step=1, limit=5
    $region2: #{tpu_custom_call.1} parent=1 // loop_pre_header
      _
    $region3: #{tpu_custom_call.1} parent=1 // loop_header
      %s20 = sphi 0, %s24
      %p21 = scmp.ge.s32.totalorder %s20, 5
      %s28 = sphi 0, %s28
      %s30 = sphi 0, %s28
      %s31 = sphi 0, %s30
      %s45 = sphi 0, %s31
      %s51 = sphi 0, %s53
      %s54 = sphi 0, %s51
      %s55 = sphi 0, %s54
      %s71 = sphi 0, %s55
      %s77 = sphi 0, %s79
      %s80 = sphi 0, %s77
      %s81 = sphi 0, %s80
      %s97 = sphi 0, %s81
      %s103 = sphi 0, %s105
      %s106 = sphi 0, %s103
      %s107 = sphi 0, %s106
      %s123 = sphi 0, %s107
    $region4: #{tpu_custom_call.1} parent=1 // loop_header_branch
      %23 = sbr.rel (%p21) target = $region8
    $region5: #{tpu_custom_call.1} parent=1 // loop_body
      %s25 = ssub.s32 %s20, 1
      %s26 = ssub.s32 %s20, 2
      %s27 = sadd.s32 %s20, 1
      %s29 = sadd.s32 %s28, 1
      %p32 = scmp.eq.s32.totalorder %s20, 2
      %p33 = scmp.ne.s32.totalorder %s28, %s30
      %p34 = scmp.eq.s32.totalorder %s20, 0
      %p35 = por %p33, %p34
      %p36 = scmp.ne.s32.totalorder %s28, %s30
      %p37 = scmp.eq.s32.totalorder %s25, 2
      %p38 = por %p36, %p37
      %p39 = scmp.ne.s32.totalorder %s30, %s31
      %p40 = scmp.eq.s32.totalorder %s25, 0
      %p41 = por %p39, %p40
      %p42 = scmp.ne.s32.totalorder %s30, %s31
      %p43 = scmp.eq.s32.totalorder %s26, 2
      %p44 = por %p42, %p43
      %p46 = scmp.ne.s32.totalorder %s31, %s45
      %p47 = scmp.eq.s32.totalorder %s26, 0
      %p48 = por %p46, %p47
      %s49 = ssub.s32 %s20, %s27
      %p50 = scmp.eq.s32.totalorder %s49, 0
      %s52 = sadd.s32 %s51, 1
      %s53 = scalar_select %p50, %s51, %s52
      %p56 = pneg %p50
      %p57 = scmp.eq.s32.totalorder %s20, 2
      %p58 = por %p56, %p57
      %p59 = scmp.ne.s32.totalorder %s51, %s54
      %p60 = scmp.eq.s32.totalorder %s20, 0
      %p61 = por %p59, %p60
      %p62 = scmp.ne.s32.totalorder %s51, %s54
      %p63 = scmp.eq.s32.totalorder %s25, 2
      %p64 = por %p62, %p63
      %p65 = scmp.ne.s32.totalorder %s54, %s55
      %p66 = scmp.eq.s32.totalorder %s25, 0
      %p67 = por %p65, %p66
      %p68 = scmp.ne.s32.totalorder %s54, %s55
      %p69 = scmp.eq.s32.totalorder %s26, 2
      %p70 = por %p68, %p69
      %p72 = scmp.ne.s32.totalorder %s55, %s71
      %p73 = scmp.eq.s32.totalorder %s26, 0
      %p74 = por %p72, %p73
      %s75 = ssub.s32 %s20, %s27
      %p76 = scmp.eq.s32.totalorder %s75, 0
      %s78 = sadd.s32 %s77, 1
      %s79 = scalar_select %p76, %s77, %s78
      %p82 = pneg %p76
      %p83 = scmp.eq.s32.totalorder %s20, 2
      %p84 = por %p82, %p83
      %p85 = scmp.ne.s32.totalorder %s77, %s80
      %p86 = scmp.eq.s32.totalorder %s20, 0
      %p87 = por %p85, %p86
      %p88 = scmp.ne.s32.totalorder %s77, %s80
      %p89 = scmp.eq.s32.totalorder %s25, 2
      %p90 = por %p88, %p89
      %p91 = scmp.ne.s32.totalorder %s80, %s81
      %p92 = scmp.eq.s32.totalorder %s25, 0
      %p93 = por %p91, %p92
      %p94 = scmp.ne.s32.totalorder %s80, %s81
      %p95 = scmp.eq.s32.totalorder %s26, 2
      %p96 = por %p94, %p95
      %p98 = scmp.ne.s32.totalorder %s81, %s97
      %p99 = scmp.eq.s32.totalorder %s26, 0
      %p100 = por %p98, %p99
      %s101 = ssub.s32 %s20, %s27
      %p102 = scmp.eq.s32.totalorder %s101, 0
      %s104 = sadd.s32 %s103, 1
      %s105 = scalar_select %p102, %s103, %s104
      %p108 = pneg %p102
      %p109 = scmp.eq.s32.totalorder %s20, 2
      %p110 = por %p108, %p109
      %p111 = scmp.ne.s32.totalorder %s103, %s106
      %p112 = scmp.eq.s32.totalorder %s20, 0
      %p113 = por %p111, %p112
      %p114 = scmp.ne.s32.totalorder %s103, %s106
      %p115 = scmp.eq.s32.totalorder %s25, 2
      %p116 = por %p114, %p115
      %p117 = scmp.ne.s32.totalorder %s106, %s107
      %p118 = scmp.eq.s32.totalorder %s25, 0
      %p119 = por %p117, %p118
      %p120 = scmp.ne.s32.totalorder %s106, %s107
      %p121 = scmp.eq.s32.totalorder %s26, 2
      %p122 = por %p120, %p121
      %p124 = scmp.ne.s32.totalorder %s107, %s123
      %p125 = scmp.eq.s32.totalorder %s26, 0
      %p126 = por %p124, %p125
      %p127 = scmp.le.s32.totalorder 1, %s20
      %p128 = scmp.lt.s32.totalorder %s20, 4
      %p129 = pnand %p127, %p128
      %p130 = pneg %p129
      // Predicated region
      $region9: #{tpu_custom_call.1} parent=5 // pred_check
        _
      $region10: #{tpu_custom_call.1} parent=5 // pred_check_branch
        %132 = sbr.rel (%p129) target = $region12
      $region11: #{tpu_custom_call.1} parent=5 // pred_region
        %s133 = ssub.s32 %s20, 1
        // Predicated region
        $region13: #{tpu_custom_call.1} parent=11 // pred_check
          %p134 = pneg %p41
        $region14: #{tpu_custom_call.1} parent=11 // pred_check_branch
          %136 = sbr.rel (%p134) target = $region16
        $region15: #{tpu_custom_call.1} parent=11 // pred_region
          %s138 = ssub.s32 64, 64
          %139 = vsyncadd [#allocation3], %s138
          %s141 = sshll.u32 [#allocation2], 4
          %s142 = int_to_ptr.vmem [resolvable:$true] %s141
          %144 = dma.hbm_to_vmem [thread:$0]  %s0, 64, %s142, [#allocation3]
        $region16: #{tpu_custom_call.1} parent=11 // pred_fallthru
          _
      $region12: #{tpu_custom_call.1} parent=5 // pred_fallthru
        _
      %p145 = scmp.lt.s32.totalorder %s20, 3
      // Predicated region
      $region17: #{tpu_custom_call.1} parent=5 // pred_check
        %p146 = pneg %p145
      $region18: #{tpu_custom_call.1} parent=5 // pred_check_branch
        %148 = sbr.rel (%p146) target = $region20
      $region19: #{tpu_custom_call.1} parent=5 // pred_region
        // Predicated region
        $region21: #{tpu_custom_call.1} parent=19 // pred_check
          %p149 = pneg %p61
        $region22: #{tpu_custom_call.1} parent=19 // pred_check_branch
          %151 = sbr.rel (%p149) target = $region24
        $region23: #{tpu_custom_call.1} parent=19 // pred_region
          %s152 = sand.u32 %s51, 1
          %s153 = scalar_lea.sflag [#allocation6], %s152
          %s154 = sand.u32 %s51, 1
          %s155 = smul.addr %s154, 24
          %s156 = scalar_lea.vmem [#allocation5], %s155
          %s157 = smul.u32 3, %s20
          %s159 = ssub.s32 384, 384
          %160 = vsyncadd %s153, %s159
          %s161 = smul.addr %s157, 128
          %s162 = scalar_lea.hbm %s1, %s161
          %s163 = sshll.u32 %s156, 4
          %s164 = int_to_ptr.vmem [resolvable:$true] %s163
          %169 = dma.hbm_to_vmem [thread:$0]  %s162, 384, %s164, %s153, 128, 128, 8
        $region24: #{tpu_custom_call.1} parent=19 // pred_fallthru
          _
      $region20: #{tpu_custom_call.1} parent=5 // pred_fallthru
        _
      %p170 = scmp.le.s32.totalorder 1, %s20
      %p171 = scmp.lt.s32.totalorder %s20, 4
      %p172 = pnand %p170, %p171
      %p173 = pneg %p172
      // Predicated region
      $region25: #{tpu_custom_call.1} parent=5 // pred_check
        _
      $region26: #{tpu_custom_call.1} parent=5 // pred_check_branch
        %175 = sbr.rel (%p172) target = $region28
      $region27: #{tpu_custom_call.1} parent=5 // pred_region
        %s176 = ssub.s32 %s20, 1
        // Predicated region
        $region29: #{tpu_custom_call.1} parent=27 // pred_check
          %p177 = pneg %p41
        $region30: #{tpu_custom_call.1} parent=27 // pred_check_branch
          %179 = sbr.rel (%p177) target = $region32
        $region31: #{tpu_custom_call.1} parent=27 // pred_region
          %180 = dma.done [#allocation3], 64
        $region32: #{tpu_custom_call.1} parent=27 // pred_fallthru
          _
        %s181 = sand.u32 %s54, 1
        %s182 = scalar_lea.sflag [#allocation6], %s181
        %s183 = sand.u32 %s54, 1
        %s184 = smul.addr %s183, 24
        %s185 = scalar_lea.vmem [#allocation5], %s184
        // Predicated region
        $region33: #{tpu_custom_call.1} parent=27 // pred_check
          %p186 = pneg %p67
        $region34: #{tpu_custom_call.1} parent=27 // pred_check_branch
          %188 = sbr.rel (%p186) target = $region36
        $region35: #{tpu_custom_call.1} parent=27 // pred_region
          %189 = dma.done %s182, 384
        $region36: #{tpu_custom_call.1} parent=27 // pred_fallthru
          _
        %p190 = pneg %p41
        %p191 = pneg %p38
        %s192 = sand.u32 %s54, 1
        %s193 = scalar_lea.sflag [#allocation6], %s192
        %s194 = sand.u32 %s54, 1
        %s195 = smul.addr %s194, 24
        %s196 = scalar_lea.vmem [#allocation5], %s195
        %p197 = pneg %p67
        %p198 = pneg %p64
        %p199 = pneg %p93
        %p200 = pneg %p90
        %s201 = sand.u32 %s80, 1
        %s202 = scalar_lea.sflag [#allocation4], %s201
        %s203 = sand.u32 %s80, 1
        %s204 = smul.addr %s203, 24
        %s205 = scalar_lea.vmem [#allocation7], %s204
        %p206 = pneg %p119
        %p207 = pneg %p116
        %s208 = sand.u32 %s106, 1
        %s209 = scalar_lea.sflag [#allocation9], %s208
        %s210 = sand.u32 %s106, 1
        %s211 = smul.addr %s210, 24
        %s212 = scalar_lea.vmem [#allocation8], %s211
        %s213 = smul.u32 3, %s25
        %s214 = smul.u32 3, %s25
        %s215 = smul.u32 3, %s25
        %v216 = vld [vmem:[#allocation2] sm:$0x1]
        %v217 = vld [vmem:[#allocation2 + $0x1] sm:$0x1]
        %v218 = vld [vmem:[#allocation2 + $0x2] sm:$0x1]
        %v219 = vld [vmem:[%s185] sm:$0xff]
        %v220 = vld [vmem:[%s185 + $0x8] sm:$0xff]
        %v221 = vld [vmem:[%s185 + $0x10] sm:$0xff]
        %222 = vrot.lane.b32.xlu0 %v219, 127
        %v223 = vpop.permute.xlu0 %222
        %224 = vrot.lane.b32.xlu0 %v220, 127
        %v225 = vpop.permute.xlu0 %224
        %226 = vrot.lane.b32.xlu0 %v221, 127
        %v227 = vpop.permute.xlu0 %226
        %v228 = vlaneseq
        %v229 = vshrl.u32 %v228, 7
        %v230 = vsub.s32 0, %v229
        %v231 = vrot.slane %v217, %v230
        %v232 = vmul.f32 %v231, %v223
        %v233 = vmul.f32 %v231, %v225
        %v234 = vmul.f32 %v231, %v227
        %235 = vrot.lane.b32.xlu0 %v219, 1
        %v236 = vpop.permute.xlu0 %235
        %237 = vrot.lane.b32.xlu0 %v220, 1
        %v238 = vpop.permute.xlu0 %237
        %239 = vrot.lane.b32.xlu0 %v221, 1
        %v240 = vpop.permute.xlu0 %239
        %v241 = vlaneseq
        %v242 = vshrl.u32 %v241, 7
        %v243 = vsub.s32 0, %v242
        %v244 = vrot.slane %v218, %v243
        %v245 = vmul.f32 %v244, %v236
        %v246 = vmul.f32 %v244, %v238
        %v247 = vmul.f32 %v244, %v240
        %v248 = vadd.f32 %v232, %v245
        %v249 = vadd.f32 %v233, %v246
        %v250 = vadd.f32 %v234, %v247
        %v251 = vlaneseq
        %v252 = vshrl.u32 %v251, 7
        %v253 = vsub.s32 0, %v252
        %v254 = vrot.slane %v216, %v253
        %v255 = vmul.f32 %v254, %v219
        %v256 = vmul.f32 %v254, %v220
        %v257 = vmul.f32 %v254, %v221
        %258 = vst [vmem:[%s205] sm:$0xff] %v255
        %259 = vst [vmem:[%s205 + $0x8] sm:$0xff] %v256
        %260 = vst [vmem:[%s205 + $0x10] sm:$0xff] %v257
        %261 = vst [vmem:[%s212] sm:$0xff] %v248
        %262 = vst [vmem:[%s212 + $0x8] sm:$0xff] %v249
        %263 = vst [vmem:[%s212 + $0x10] sm:$0xff] %v250
        %s264 = sand.u32 %s80, 1
        %s265 = scalar_lea.sflag [#allocation4], %s264
        %s266 = sand.u32 %s80, 1
        %s267 = smul.addr %s266, 24
        %s268 = scalar_lea.vmem [#allocation7], %s267
        %s269 = sand.u32 %s106, 1
        %s270 = scalar_lea.sflag [#allocation9], %s269
        %s271 = sand.u32 %s106, 1
        %s272 = smul.addr %s271, 24
        %s273 = scalar_lea.vmem [#allocation8], %s272
        // Predicated region
        $region37: #{tpu_custom_call.1} parent=27 // pred_check
          %p274 = pneg %p90
        $region38: #{tpu_custom_call.1} parent=27 // pred_check_branch
          %276 = sbr.rel (%p274) target = $region40
        $region39: #{tpu_custom_call.1} parent=27 // pred_region
          %s277 = smul.u32 3, %s25
          %s279 = ssub.s32 384, 384
          %280 = vsyncadd %s265, %s279
          %s281 = smul.addr %s277, 128
          %s282 = scalar_lea.hbm %s2, %s281
          %s283 = sshll.u32 %s268, 4
          %s284 = int_to_ptr.vmem [resolvable:$true] %s283
          %289 = dma.vmem_to_hbm [thread:$0]  %s284, 384, %s282, %s265, 128, 128, 8
        $region40: #{tpu_custom_call.1} parent=27 // pred_fallthru
          _
        // Predicated region
        $region41: #{tpu_custom_call.1} parent=27 // pred_check
          %p290 = pneg %p116
        $region42: #{tpu_custom_call.1} parent=27 // pred_check_branch
          %292 = sbr.rel (%p290) target = $region44
        $region43: #{tpu_custom_call.1} parent=27 // pred_region
          %s293 = smul.u32 3, %s25
          %s295 = ssub.s32 384, 384
          %296 = vsyncadd %s270, %s295
          %s297 = smul.addr %s293, 128
          %s298 = scalar_lea.hbm %s3, %s297
          %s299 = sshll.u32 %s273, 4
          %s300 = int_to_ptr.vmem [resolvable:$true] %s299
          %305 = dma.vmem_to_hbm [thread:$0]  %s300, 384, %s298, %s270, 128, 128, 8
        $region44: #{tpu_custom_call.1} parent=27 // pred_fallthru
          _
      $region28: #{tpu_custom_call.1} parent=5 // pred_fallthru
        _
      %p306 = scmp.le.s32.totalorder 2, %s20
      // Predicated region
      $region45: #{tpu_custom_call.1} parent=5 // pred_check
        %p307 = pneg %p306
      $region46: #{tpu_custom_call.1} parent=5 // pred_check_branch
        %309 = sbr.rel (%p307) target = $region48
      $region47: #{tpu_custom_call.1} parent=5 // pred_region
        %s310 = ssub.s32 %s20, 2
        // Predicated region
        $region49: #{tpu_custom_call.1} parent=47 // pred_check
          %p311 = pneg %p96
        $region50: #{tpu_custom_call.1} parent=47 // pred_check_branch
          %313 = sbr.rel (%p311) target = $region52
        $region51: #{tpu_custom_call.1} parent=47 // pred_region
          %s314 = sand.u32 %s81, 1
          %s315 = scalar_lea.sflag [#allocation4], %s314
          %s316 = sand.u32 %s81, 1
          %s317 = smul.addr %s316, 24
          %s318 = scalar_lea.vmem [#allocation7], %s317
          %319 = dma.done %s315, 384
        $region52: #{tpu_custom_call.1} parent=47 // pred_fallthru
          _
        // Predicated region
        $region53: #{tpu_custom_call.1} parent=47 // pred_check
          %p320 = pneg %p122
        $region54: #{tpu_custom_call.1} parent=47 // pred_check_branch
          %322 = sbr.rel (%p320) target = $region56
        $region55: #{tpu_custom_call.1} parent=47 // pred_region
          %s323 = sand.u32 %s107, 1
          %s324 = scalar_lea.sflag [#allocation9], %s323
          %s325 = sand.u32 %s107, 1
          %s326 = smul.addr %s325, 24
          %s327 = scalar_lea.vmem [#allocation8], %s326
          %328 = dma.done %s324, 384
        $region56: #{tpu_custom_call.1} parent=47 // pred_fallthru
          _
      $region48: #{tpu_custom_call.1} parent=5 // pred_fallthru
        _
    $region6: #{tpu_custom_call.1} parent=1 // loop_footer
      %s24 = sadd.s32 1, %s20
    $region7: #{tpu_custom_call.1} parent=1 // loop_footer_branch
      %19 = sbr.rel target = $region3
    $region8: #{tpu_custom_call.1} parent=1 // loop_exit
      _
    %329 = vsyncpa [#allocation3], 1
    %s330 = scalar_lea.sflag [#allocation3], 1
    %331 = vsyncpa %s330, 1
    %332 = vsyncpa [#allocation6], 1
    %s333 = scalar_lea.sflag [#allocation6], 1
    %334 = vsyncpa %s333, 1
    %335 = vsyncpa [#allocation4], 1
    %s336 = scalar_lea.sflag [#allocation4], 1
    %337 = vsyncpa %s336, 1
    %338 = vsyncpa [#allocation9], 1
    %s339 = scalar_lea.sflag [#allocation9], 1
    %340 = vsyncpa %s339, 1

</llo_original>
